<compile_context>
chip_gen: v7x
topology: tpu7x:2x2x1
jax: 0.10.0
libtpu: 0.0.40
codegen_flags: <defaults>
</compile_context>

<pallas_src>
import jax
import jax.numpy as jnp
from jax import lax
from jax.experimental import pallas as pl
from jax.experimental.pallas import tpu as pltpu


def lstm_vae_encoder_kernel(x_ref, wih_ref, whh_ref, b_ref, whead_ref, bhead_ref,
                            out_ref, xp_ref):
    # x_ref:     (T*Btile, D)   time-major, batch-tiled, pre-flattened input
    # wih_ref:   (D, 4H)        input->gate weights, gate order (i, f, o, g),
    #                           i/f/o columns pre-scaled by 0.5
    # whh_ref:   (H, 4H)        hidden->gate weights, same order / pre-scale
    # b_ref:     (1, 4H)        b_ih + b_hh, same order / pre-scale (f32)
    # whead_ref: (H, Hp2)       [W_mean.T | W_logvar.T | 0-pad]   (Hp2 >= 128)
    # bhead_ref: (1, Hp2)       [b_mean   | b_logvar   | 0-pad]   (f32)
    # out_ref:   (Btile, Hp2)   [mean | logvar | pad] for the final hidden state
    # xp_ref:    (T*Btile, 4H)  VMEM scratch: hoisted input projection (f32)
    TB, D = x_ref.shape
    H4 = whh_ref.shape[1]
    H = H4 // 4
    Btile = out_ref.shape[0]
    T = TB // Btile

    # --- Hoisted input projection: one big MXU matmul, bias folded in ---
    xp_ref[...] = (jnp.dot(x_ref[...], wih_ref[...],
                           preferred_element_type=jnp.float32) + b_ref[...])

    whh = whh_ref[...]

    # Constant per-column scale/offset turning tanh(pre-scaled gates) back into
    # sigmoid for the i/f/o columns (identity on the g column). Hoisted out of
    # the recurrence; one full-width VPU FMA per step.
    col = lax.broadcasted_iota(jnp.int32, (1, H4), 1)
    act_scale = jnp.where(col < 3 * H, jnp.float32(0.5), jnp.float32(1.0))
    act_off = jnp.where(col < 3 * H, jnp.float32(0.5), jnp.float32(0.0))

    # --- Recurrence: per step only h @ W_hh + one tanh + one FMA + cell math ---
    def step(t, carry):
        h, c = carry
        row = pl.multiple_of(t * Btile, 8)          # Btile is a multiple of 8
        gates = xp_ref[pl.ds(row, Btile), :] + jnp.dot(
            h.astype(whh.dtype), whh, preferred_element_type=jnp.float32)
        act = jnp.tanh(gates) * act_scale + act_off  # 1 EUP launch + 1 VPU FMA
        i = act[:, :H]
        f = act[:, H:2 * H]
        o = act[:, 2 * H:3 * H]
        g = act[:, 3 * H:]
        c_new = f * c + i * g
        h_new = o * jnp.tanh(c_new)
        return (h_new, c_new)

    h0 = jnp.zeros((Btile, H), jnp.float32)
    c0 = jnp.zeros((Btile, H), jnp.float32)
    h, _ = lax.fori_loop(0, T, step, (h0, c0), unroll=min(T, 8))

    # --- Fused, lane-dense mean/logvar head: one matmul, one unmasked store ---
    out_ref[...] = (jnp.dot(h.astype(whead_ref.dtype), whead_ref[...],
                            preferred_element_type=jnp.float32) + bhead_ref[...])


def prepare_params(params, compute_dtype=jnp.float32):
    """One-time weight prep (outside the hot path):
      - gate reorder PyTorch (i, f, g, o) -> (i, f, o, g)
      - transpose to (in, 4H), fold b_ih + b_hh
      - pre-scale i/f/o columns by 0.5 (sigmoid-via-tanh trick)
      - fuse + zero-pad the mean/logvar heads to a >=128-lane last dim
      - optional bf16 cast of the MXU operands (v6e/v7x)."""
    W_ih, W_hh, b_ih, b_hh, W_mean, b_mean, W_logvar, b_logvar = params
    H = W_hh.shape[1]

    def gate_reorder(a):  # rows (i, f, g, o) -> (i, f, o, g) along axis 0
        return jnp.concatenate([a[:H], a[H:2 * H], a[3 * H:], a[2 * H:3 * H]],
                               axis=0)

    col_scale = jnp.concatenate([jnp.full((3 * H,), 0.5, jnp.float32),
                                 jnp.ones((H,), jnp.float32)])

    wih = (gate_reorder(W_ih).T.astype(jnp.float32) * col_scale).astype(compute_dtype)
    whh = (gate_reorder(W_hh).T.astype(jnp.float32) * col_scale).astype(compute_dtype)
    b = ((gate_reorder(b_ih + b_hh).astype(jnp.float32) * col_scale)
         .reshape(1, -1))                                              # f32

    Hp2 = ((2 * H + 127) // 128) * 128
    whead = jnp.zeros((H, Hp2), jnp.float32)
    whead = whead.at[:, :H].set(W_mean.T).at[:, H:2 * H].set(W_logvar.T)
    whead = whead.astype(compute_dtype)
    bhead = jnp.zeros((1, Hp2), jnp.float32)
    bhead = bhead.at[0, :H].set(b_mean).at[0, H:2 * H].set(b_logvar)   # f32
    return (wih, whh, b, whead, bhead)


def lstm_variational_encoder(x, prepped, *, batch_tile=None):
    """x: (B, T, D) batch-first.  Returns (mean, logvar), each (B, 1, H) f32."""
    wih, whh, b, whead, bhead = prepped
    B, T, D = x.shape
    H = whh.shape[0]
    H4 = 4 * H
    Hp2 = whead.shape[1]

    if batch_tile is None:
        # Single tile at small B; shrink (e.g. Bp // 2, multiple of 8) on v7x so
        # the "parallel" grid axis spans both TensorCores once B is large.
        batch_tile = min(128, ((B + 7) // 8) * 8)
    Bp = pl.cdiv(B, batch_tile) * batch_tile
    Bb = Bp // batch_tile

    # Layout prep (single XLA copy): pad batch, tile it, make time-major within
    # each tile and pre-flatten to (Bb, T*Btile, D) so the kernel never reshapes.
    xc = x.astype(wih.dtype)
    if Bp != B:
        xc = jnp.pad(xc, ((0, Bp - B), (0, 0), (0, 0)))
    xc = (xc.reshape(Bb, batch_tile, T, D)
            .transpose(0, 2, 1, 3)
            .reshape(Bb, T * batch_tile, D))

    # Explicit VMEM budget (feedback: do not rely on per-chip scoped defaults;
    # v7x has only 64 MiB physical). Footprint here is tiny, so a small cap works.
    isz = wih.dtype.itemsize
    x_blk = T * batch_tile * D * isz
    out_blk = batch_tile * Hp2 * 4
    xp_bytes = T * batch_tile * H4 * 4
    w_bytes = (wih.size + whh.size + whead.size) * isz + (b.size + bhead.size) * 4
    need = 2 * (x_blk + out_blk) + xp_bytes + w_bytes
    vmem_limit = int(min(max(16 << 20, 2 * need), 64 << 20))

    vmem_full = pl.BlockSpec(memory_space=pltpu.MemorySpace.VMEM)
    out = pl.pallas_call(
        lstm_vae_encoder_kernel,
        out_shape=jax.ShapeDtypeStruct((Bp, Hp2), jnp.float32),
        grid=(Bb,),
        in_specs=[
            pl.BlockSpec((None, T * batch_tile, D), lambda bb: (bb, 0, 0)),  # x
            vmem_full,   # wih
            vmem_full,   # whh
            vmem_full,   # b
            vmem_full,   # whead
            vmem_full,   # bhead
        ],
        out_specs=pl.BlockSpec((batch_tile, Hp2), lambda bb: (bb, 0)),
        scratch_shapes=[pltpu.VMEM((T * batch_tile, H4), jnp.float32)],
        compiler_params=pltpu.CompilerParams(
            dimension_semantics=("parallel",),
            vmem_limit_bytes=vmem_limit),
    )(xc, wih, whh, b, whead, bhead)

    mean = out[:B, :H].reshape(B, 1, H)
    logvar = out[:B, H:2 * H].reshape(B, 1, H)
    return mean, logvar


def init_params(key, input_size, hidden_size):
    """Deterministic init matching the shapes of nn.LSTM / nn.Linear params."""
    k = 1.0 / jnp.sqrt(hidden_size)
    ks = jax.random.split(key, 8)
    W_ih = jax.random.uniform(ks[0], (4 * hidden_size, input_size), jnp.float32, -k, k)
    W_hh = jax.random.uniform(ks[1], (4 * hidden_size, hidden_size), jnp.float32, -k, k)
    b_ih = jax.random.uniform(ks[2], (4 * hidden_size,), jnp.float32, -k, k)
    b_hh = jax.random.uniform(ks[3], (4 * hidden_size,), jnp.float32, -k, k)
    W_mean = jax.random.uniform(ks[4], (hidden_size, hidden_size), jnp.float32, -k, k)
    b_mean = jax.random.uniform(ks[5], (hidden_size,), jnp.float32, -k, k)
    W_logvar = jax.random.uniform(ks[6], (hidden_size, hidden_size), jnp.float32, -k, k)
    b_logvar = jax.random.uniform(ks[7], (hidden_size,), jnp.float32, -k, k)
    return (W_ih, W_hh, b_ih, b_hh, W_mean, b_mean, W_logvar, b_logvar)


def reference(x, params):
    """Pure-JAX reference reproducing the PyTorch module (f32, gate order i,f,g,o)."""
    W_ih, W_hh, b_ih, b_hh, W_mean, b_mean, W_logvar, b_logvar = params
    B, T, D = x.shape
    H = W_hh.shape[1]
    h = jnp.zeros((B, H), jnp.float32)
    c = jnp.zeros((B, H), jnp.float32)
    for t in range(T):
        gt = x[:, t] @ W_ih.T + b_ih + h @ W_hh.T + b_hh
        i = jax.nn.sigmoid(gt[:, :H])
        f = jax.nn.sigmoid(gt[:, H:2 * H])
        g = jnp.tanh(gt[:, 2 * H:3 * H])
        o = jax.nn.sigmoid(gt[:, 3 * H:])
        c = f * c + i * g
        h = o * jnp.tanh(c)
    mean = (h @ W_mean.T + b_mean).reshape(B, 1, H)
    logvar = (h @ W_logvar.T + b_logvar).reshape(B, 1, H)
    return mean, logvar


if __name__ == "__main__":
    B, T, D, H = 2, 8, 16, 32        # batch, seq_len, input_size, hidden_size

    key = jax.random.PRNGKey(0)
    kx, kp = jax.random.split(key)
    x = jax.random.normal(kx, (B, T, D), jnp.float32)
    params = init_params(kp, D, H)

    prepped = prepare_params(params)              # one-time weight prep (f32 path)
    fwd = jax.jit(lstm_variational_encoder)
    mean, logvar = fwd(x, prepped)
    jax.block_until_ready((mean, logvar))

    assert mean.shape == (B, 1, H) and logvar.shape == (B, 1, H)
    assert bool(jnp.all(jnp.isfinite(mean))) and bool(jnp.all(jnp.isfinite(logvar)))

    mean_ref, logvar_ref = reference(x, params)
    assert bool(jnp.allclose(mean, mean_ref, rtol=2e-4, atol=2e-4))
    assert bool(jnp.allclose(logvar, logvar_ref, rtol=2e-4, atol=2e-4))

    print("KERNEL_OK")
</pallas_src>

<mosaic_0001>
module attributes {stable_mosaic.version = 11 : i64} {
  func.func @lstm_vae_encoder_kernel(%arg0: i32, %arg1: memref<1x64x16xf32, #tpu.memory_space<vmem>>, %arg2: memref<16x128xf32, #tpu.memory_space<vmem>>, %arg3: memref<32x128xf32, #tpu.memory_space<vmem>>, %arg4: memref<1x128xf32, #tpu.memory_space<vmem>>, %arg5: memref<32x128xf32, #tpu.memory_space<vmem>>, %arg6: memref<1x128xf32, #tpu.memory_space<vmem>>, %arg7: memref<8x128xf32, #tpu.memory_space<vmem>>, %arg8: memref<64x128xf32, #tpu.memory_space<vmem>>) attributes {dimension_semantics = [#tpu.dimension_semantics<parallel>], iteration_bounds = array<i64: 1>, scalar_prefetch = 0 : i64, scratch_operands = 1 : i64, tpu.core_type = #tpu.core_type<tc>, window_params = [{transform_indices = @transform_0, window_bounds = array<i64: 1, 64, 16>}, {pipeline_mode = #tpu.pipeline_mode<synchronous>, transform_indices = @transform_1, window_bounds = array<i64: 16, 128>}, {pipeline_mode = #tpu.pipeline_mode<synchronous>, transform_indices = @transform_2, window_bounds = array<i64: 32, 128>}, {pipeline_mode = #tpu.pipeline_mode<synchronous>, transform_indices = @transform_3, window_bounds = array<i64: 1, 128>}, {pipeline_mode = #tpu.pipeline_mode<synchronous>, transform_indices = @transform_4, window_bounds = array<i64: 32, 128>}, {pipeline_mode = #tpu.pipeline_mode<synchronous>, transform_indices = @transform_5, window_bounds = array<i64: 1, 128>}, {transform_indices = @transform_6, window_bounds = array<i64: 8, 128>}]} {
    %c0 = arith.constant 0 : index
    %c0_0 = arith.constant 0 : index
    %c0_1 = arith.constant 0 : index
    %0 = vector.load %arg1[%c0, %c0_0, %c0_1] : memref<1x64x16xf32, #tpu.memory_space<vmem>>, vector<1x64x16xf32>
    %1 = vector.shape_cast %0 : vector<1x64x16xf32> to vector<64x16xf32>
    %c0_2 = arith.constant 0 : index
    %c0_3 = arith.constant 0 : index
    %2 = vector.load %arg2[%c0_2, %c0_3] : memref<16x128xf32, #tpu.memory_space<vmem>>, vector<16x128xf32>
    %cst = arith.constant dense<0.000000e+00> : vector<64x128xf32>
    %3 = tpu.matmul %1, %2, %cst {dimension_numbers = #tpu.dot_dimension_numbers<[1], [0], [0], [1], [0, 0, 1, 1], [], []>} : vector<64x16xf32>, vector<16x128xf32>, vector<64x128xf32> -> vector<64x128xf32>
    %c0_4 = arith.constant 0 : index
    %c0_5 = arith.constant 0 : index
    %4 = vector.load %arg4[%c0_4, %c0_5] : memref<1x128xf32, #tpu.memory_space<vmem>>, vector<1x128xf32>
    %5 = vector.broadcast %4 : vector<1x128xf32> to vector<64x128xf32>
    %6 = arith.addf %3, %5 : vector<64x128xf32>
    %c0_6 = arith.constant 0 : index
    %c0_7 = arith.constant 0 : index
    %7 = vector.load %arg8[%c0_6, %c0_7] : memref<64x128xf32, #tpu.memory_space<vmem>>, vector<64x128xf32>
    tpu.vector_store %arg8[%c0_6, %c0_7], %6 {strides = array<i32>} : memref<64x128xf32, #tpu.memory_space<vmem>>, vector<64x128xf32>,
    %c0_8 = arith.constant 0 : index
    %c0_9 = arith.constant 0 : index
    %8 = vector.load %arg3[%c0_8, %c0_9] : memref<32x128xf32, #tpu.memory_space<vmem>>, vector<32x128xf32>
    %9 = tpu.iota {dimensions = array<i32: 1>} : vector<1x128xi32>
    %c96_i32 = arith.constant 96 : i32
    %10 = vector.broadcast %c96_i32 : i32 to vector<1x128xi32>
    %11 = arith.cmpi slt, %9, %10 : vector<1x128xi32>
    %cst_10 = arith.constant 5.000000e-01 : f32
    %cst_11 = arith.constant 1.000000e+00 : f32
    %12 = vector.broadcast %cst_10 : f32 to vector<1x128xf32>
    %13 = vector.broadcast %cst_11 : f32 to vector<1x128xf32>
    %14 = arith.select %11, %12, %13 : vector<1x128xi1>, vector<1x128xf32>
    %c96_i32_12 = arith.constant 96 : i32
    %15 = vector.broadcast %c96_i32_12 : i32 to vector<1x128xi32>
    %16 = arith.cmpi slt, %9, %15 : vector<1x128xi32>
    %cst_13 = arith.constant 5.000000e-01 : f32
    %cst_14 = arith.constant 0.000000e+00 : f32
    %17 = vector.broadcast %cst_13 : f32 to vector<1x128xf32>
    %18 = vector.broadcast %cst_14 : f32 to vector<1x128xf32>
    %19 = arith.select %16, %17, %18 : vector<1x128xi1>, vector<1x128xf32>
    %cst_15 = arith.constant 0.000000e+00 : f32
    %20 = vector.broadcast %cst_15 : f32 to vector<8x32xf32>
    %cst_16 = arith.constant 0.000000e+00 : f32
    %21 = vector.broadcast %cst_16 : f32 to vector<8x32xf32>
    %c0_i32 = arith.constant 0 : i32
    %c8_i32 = arith.constant 8 : i32
    %22 = arith.muli %c0_i32, %c8_i32 : i32
    %23 = tpu.assume_multiple %22, 8 : i32
    %24 = arith.index_cast %23 : i32 to index
    %c0_17 = arith.constant 0 : index
    %25 = vector.load %arg8[%24, %c0_17] : memref<64x128xf32, #tpu.memory_space<vmem>>, vector<8x128xf32>
    %cst_18 = arith.constant dense<0.000000e+00> : vector<8x128xf32>
    %26 = tpu.matmul %20, %8, %cst_18 {dimension_numbers = #tpu.dot_dimension_numbers<[1], [0], [0], [1], [0, 0, 1, 1], [], []>} : vector<8x32xf32>, vector<32x128xf32>, vector<8x128xf32> -> vector<8x128xf32>
    %27 = arith.addf %25, %26 : vector<8x128xf32>
    %28 = math.tanh %27 : vector<8x128xf32>
    %29 = vector.broadcast %14 : vector<1x128xf32> to vector<8x128xf32>
    %30 = arith.mulf %28, %29 : vector<8x128xf32>
    %31 = vector.broadcast %19 : vector<1x128xf32> to vector<8x128xf32>
    %32 = arith.addf %30, %31 : vector<8x128xf32>
    %33 = vector.extract_strided_slice %32 {offsets = [0, 0], sizes = [8, 32], strides = [1, 1]} : vector<8x128xf32> to vector<8x32xf32>
    %34 = vector.extract_strided_slice %32 {offsets = [0, 32], sizes = [8, 32], strides = [1, 1]} : vector<8x128xf32> to vector<8x32xf32>
    %35 = vector.extract_strided_slice %32 {offsets = [0, 64], sizes = [8, 32], strides = [1, 1]} : vector<8x128xf32> to vector<8x32xf32>
    %36 = vector.extract_strided_slice %32 {offsets = [0, 96], sizes = [8, 32], strides = [1, 1]} : vector<8x128xf32> to vector<8x32xf32>
    %37 = arith.mulf %34, %21 : vector<8x32xf32>
    %38 = arith.mulf %33, %36 : vector<8x32xf32>
    %39 = arith.addf %37, %38 : vector<8x32xf32>
    %40 = math.tanh %39 : vector<8x32xf32>
    %41 = arith.mulf %35, %40 : vector<8x32xf32>
    %c1_i32 = arith.constant 1 : i32
    %c8_i32_19 = arith.constant 8 : i32
    %42 = arith.muli %c1_i32, %c8_i32_19 : i32
    %43 = tpu.assume_multiple %42, 8 : i32
    %44 = arith.index_cast %43 : i32 to index
    %c0_20 = arith.constant 0 : index
    %45 = vector.load %arg8[%44, %c0_20] : memref<64x128xf32, #tpu.memory_space<vmem>>, vector<8x128xf32>
    %cst_21 = arith.constant dense<0.000000e+00> : vector<8x128xf32>
    %46 = tpu.matmul %41, %8, %cst_21 {dimension_numbers = #tpu.dot_dimension_numbers<[1], [0], [0], [1], [0, 0, 1, 1], [], []>} : vector<8x32xf32>, vector<32x128xf32>, vector<8x128xf32> -> vector<8x128xf32>
    %47 = arith.addf %45, %46 : vector<8x128xf32>
    %48 = math.tanh %47 : vector<8x128xf32>
    %49 = vector.broadcast %14 : vector<1x128xf32> to vector<8x128xf32>
    %50 = arith.mulf %48, %49 : vector<8x128xf32>
    %51 = vector.broadcast %19 : vector<1x128xf32> to vector<8x128xf32>
    %52 = arith.addf %50, %51 : vector<8x128xf32>
    %53 = vector.extract_strided_slice %52 {offsets = [0, 0], sizes = [8, 32], strides = [1, 1]} : vector<8x128xf32> to vector<8x32xf32>
    %54 = vector.extract_strided_slice %52 {offsets = [0, 32], sizes = [8, 32], strides = [1, 1]} : vector<8x128xf32> to vector<8x32xf32>
    %55 = vector.extract_strided_slice %52 {offsets = [0, 64], sizes = [8, 32], strides = [1, 1]} : vector<8x128xf32> to vector<8x32xf32>
    %56 = vector.extract_strided_slice %52 {offsets = [0, 96], sizes = [8, 32], strides = [1, 1]} : vector<8x128xf32> to vector<8x32xf32>
    %57 = arith.mulf %54, %39 : vector<8x32xf32>
    %58 = arith.mulf %53, %56 : vector<8x32xf32>
    %59 = arith.addf %57, %58 : vector<8x32xf32>
    %60 = math.tanh %59 : vector<8x32xf32>
    %61 = arith.mulf %55, %60 : vector<8x32xf32>
    %c2_i32 = arith.constant 2 : i32
    %c8_i32_22 = arith.constant 8 : i32
    %62 = arith.muli %c2_i32, %c8_i32_22 : i32
    %63 = tpu.assume_multiple %62, 8 : i32
    %64 = arith.index_cast %63 : i32 to index
    %c0_23 = arith.constant 0 : index
    %65 = vector.load %arg8[%64, %c0_23] : memref<64x128xf32, #tpu.memory_space<vmem>>, vector<8x128xf32>
    %cst_24 = arith.constant dense<0.000000e+00> : vector<8x128xf32>
    %66 = tpu.matmul %61, %8, %cst_24 {dimension_numbers = #tpu.dot_dimension_numbers<[1], [0], [0], [1], [0, 0, 1, 1], [], []>} : vector<8x32xf32>, vector<32x128xf32>, vector<8x128xf32> -> vector<8x128xf32>
    %67 = arith.addf %65, %66 : vector<8x128xf32>
    %68 = math.tanh %67 : vector<8x128xf32>
    %69 = vector.broadcast %14 : vector<1x128xf32> to vector<8x128xf32>
    %70 = arith.mulf %68, %69 : vector<8x128xf32>
    %71 = vector.broadcast %19 : vector<1x128xf32> to vector<8x128xf32>
    %72 = arith.addf %70, %71 : vector<8x128xf32>
    %73 = vector.extract_strided_slice %72 {offsets = [0, 0], sizes = [8, 32], strides = [1, 1]} : vector<8x128xf32> to vector<8x32xf32>
    %74 = vector.extract_strided_slice %72 {offsets = [0, 32], sizes = [8, 32], strides = [1, 1]} : vector<8x128xf32> to vector<8x32xf32>
    %75 = vector.extract_strided_slice %72 {offsets = [0, 64], sizes = [8, 32], strides = [1, 1]} : vector<8x128xf32> to vector<8x32xf32>
    %76 = vector.extract_strided_slice %72 {offsets = [0, 96], sizes = [8, 32], strides = [1, 1]} : vector<8x128xf32> to vector<8x32xf32>
    %77 = arith.mulf %74, %59 : vector<8x32xf32>
    %78 = arith.mulf %73, %76 : vector<8x32xf32>
    %79 = arith.addf %77, %78 : vector<8x32xf32>
    %80 = math.tanh %79 : vector<8x32xf32>
    %81 = arith.mulf %75, %80 : vector<8x32xf32>
    %c3_i32 = arith.constant 3 : i32
    %c8_i32_25 = arith.constant 8 : i32
    %82 = arith.muli %c3_i32, %c8_i32_25 : i32
    %83 = tpu.assume_multiple %82, 8 : i32
    %84 = arith.index_cast %83 : i32 to index
    %c0_26 = arith.constant 0 : index
    %85 = vector.load %arg8[%84, %c0_26] : memref<64x128xf32, #tpu.memory_space<vmem>>, vector<8x128xf32>
    %cst_27 = arith.constant dense<0.000000e+00> : vector<8x128xf32>
    %86 = tpu.matmul %81, %8, %cst_27 {dimension_numbers = #tpu.dot_dimension_numbers<[1], [0], [0], [1], [0, 0, 1, 1], [], []>} : vector<8x32xf32>, vector<32x128xf32>, vector<8x128xf32> -> vector<8x128xf32>
    %87 = arith.addf %85, %86 : vector<8x128xf32>
    %88 = math.tanh %87 : vector<8x128xf32>
    %89 = vector.broadcast %14 : vector<1x128xf32> to vector<8x128xf32>
    %90 = arith.mulf %88, %89 : vector<8x128xf32>
    %91 = vector.broadcast %19 : vector<1x128xf32> to vector<8x128xf32>
    %92 = arith.addf %90, %91 : vector<8x128xf32>
    %93 = vector.extract_strided_slice %92 {offsets = [0, 0], sizes = [8, 32], strides = [1, 1]} : vector<8x128xf32> to vector<8x32xf32>
    %94 = vector.extract_strided_slice %92 {offsets = [0, 32], sizes = [8, 32], strides = [1, 1]} : vector<8x128xf32> to vector<8x32xf32>
    %95 = vector.extract_strided_slice %92 {offsets = [0, 64], sizes = [8, 32], strides = [1, 1]} : vector<8x128xf32> to vector<8x32xf32>
    %96 = vector.extract_strided_slice %92 {offsets = [0, 96], sizes = [8, 32], strides = [1, 1]} : vector<8x128xf32> to vector<8x32xf32>
    %97 = arith.mulf %94, %79 : vector<8x32xf32>
    %98 = arith.mulf %93, %96 : vector<8x32xf32>
    %99 = arith.addf %97, %98 : vector<8x32xf32>
    %100 = math.tanh %99 : vector<8x32xf32>
    %101 = arith.mulf %95, %100 : vector<8x32xf32>
    %c4_i32 = arith.constant 4 : i32
    %c8_i32_28 = arith.constant 8 : i32
    %102 = arith.muli %c4_i32, %c8_i32_28 : i32
    %103 = tpu.assume_multiple %102, 8 : i32
    %104 = arith.index_cast %103 : i32 to index
    %c0_29 = arith.constant 0 : index
    %105 = vector.load %arg8[%104, %c0_29] : memref<64x128xf32, #tpu.memory_space<vmem>>, vector<8x128xf32>
    %cst_30 = arith.constant dense<0.000000e+00> : vector<8x128xf32>
    %106 = tpu.matmul %101, %8, %cst_30 {dimension_numbers = #tpu.dot_dimension_numbers<[1], [0], [0], [1], [0, 0, 1, 1], [], []>} : vector<8x32xf32>, vector<32x128xf32>, vector<8x128xf32> -> vector<8x128xf32>
    %107 = arith.addf %105, %106 : vector<8x128xf32>
    %108 = math.tanh %107 : vector<8x128xf32>
    %109 = vector.broadcast %14 : vector<1x128xf32> to vector<8x128xf32>
    %110 = arith.mulf %108, %109 : vector<8x128xf32>
    %111 = vector.broadcast %19 : vector<1x128xf32> to vector<8x128xf32>
    %112 = arith.addf %110, %111 : vector<8x128xf32>
    %113 = vector.extract_strided_slice %112 {offsets = [0, 0], sizes = [8, 32], strides = [1, 1]} : vector<8x128xf32> to vector<8x32xf32>
    %114 = vector.extract_strided_slice %112 {offsets = [0, 32], sizes = [8, 32], strides = [1, 1]} : vector<8x128xf32> to vector<8x32xf32>
    %115 = vector.extract_strided_slice %112 {offsets = [0, 64], sizes = [8, 32], strides = [1, 1]} : vector<8x128xf32> to vector<8x32xf32>
    %116 = vector.extract_strided_slice %112 {offsets = [0, 96], sizes = [8, 32], strides = [1, 1]} : vector<8x128xf32> to vector<8x32xf32>
    %117 = arith.mulf %114, %99 : vector<8x32xf32>
    %118 = arith.mulf %113, %116 : vector<8x32xf32>
    %119 = arith.addf %117, %118 : vector<8x32xf32>
    %120 = math.tanh %119 : vector<8x32xf32>
    %121 = arith.mulf %115, %120 : vector<8x32xf32>
    %c5_i32 = arith.constant 5 : i32
    %c8_i32_31 = arith.constant 8 : i32
    %122 = arith.muli %c5_i32, %c8_i32_31 : i32
    %123 = tpu.assume_multiple %122, 8 : i32
    %124 = arith.index_cast %123 : i32 to index
    %c0_32 = arith.constant 0 : index
    %125 = vector.load %arg8[%124, %c0_32] : memref<64x128xf32, #tpu.memory_space<vmem>>, vector<8x128xf32>
    %cst_33 = arith.constant dense<0.000000e+00> : vector<8x128xf32>
    %126 = tpu.matmul %121, %8, %cst_33 {dimension_numbers = #tpu.dot_dimension_numbers<[1], [0], [0], [1], [0, 0, 1, 1], [], []>} : vector<8x32xf32>, vector<32x128xf32>, vector<8x128xf32> -> vector<8x128xf32>
    %127 = arith.addf %125, %126 : vector<8x128xf32>
    %128 = math.tanh %127 : vector<8x128xf32>
    %129 = vector.broadcast %14 : vector<1x128xf32> to vector<8x128xf32>
    %130 = arith.mulf %128, %129 : vector<8x128xf32>
    %131 = vector.broadcast %19 : vector<1x128xf32> to vector<8x128xf32>
    %132 = arith.addf %130, %131 : vector<8x128xf32>
    %133 = vector.extract_strided_slice %132 {offsets = [0, 0], sizes = [8, 32], strides = [1, 1]} : vector<8x128xf32> to vector<8x32xf32>
    %134 = vector.extract_strided_slice %132 {offsets = [0, 32], sizes = [8, 32], strides = [1, 1]} : vector<8x128xf32> to vector<8x32xf32>
    %135 = vector.extract_strided_slice %132 {offsets = [0, 64], sizes = [8, 32], strides = [1, 1]} : vector<8x128xf32> to vector<8x32xf32>
    %136 = vector.extract_strided_slice %132 {offsets = [0, 96], sizes = [8, 32], strides = [1, 1]} : vector<8x128xf32> to vector<8x32xf32>
    %137 = arith.mulf %134, %119 : vector<8x32xf32>
    %138 = arith.mulf %133, %136 : vector<8x32xf32>
    %139 = arith.addf %137, %138 : vector<8x32xf32>
    %140 = math.tanh %139 : vector<8x32xf32>
    %141 = arith.mulf %135, %140 : vector<8x32xf32>
    %c6_i32 = arith.constant 6 : i32
    %c8_i32_34 = arith.constant 8 : i32
    %142 = arith.muli %c6_i32, %c8_i32_34 : i32
    %143 = tpu.assume_multiple %142, 8 : i32
    %144 = arith.index_cast %143 : i32 to index
    %c0_35 = arith.constant 0 : index
    %145 = vector.load %arg8[%144, %c0_35] : memref<64x128xf32, #tpu.memory_space<vmem>>, vector<8x128xf32>
    %cst_36 = arith.constant dense<0.000000e+00> : vector<8x128xf32>
    %146 = tpu.matmul %141, %8, %cst_36 {dimension_numbers = #tpu.dot_dimension_numbers<[1], [0], [0], [1], [0, 0, 1, 1], [], []>} : vector<8x32xf32>, vector<32x128xf32>, vector<8x128xf32> -> vector<8x128xf32>
    %147 = arith.addf %145, %146 : vector<8x128xf32>
    %148 = math.tanh %147 : vector<8x128xf32>
    %149 = vector.broadcast %14 : vector<1x128xf32> to vector<8x128xf32>
    %150 = arith.mulf %148, %149 : vector<8x128xf32>
    %151 = vector.broadcast %19 : vector<1x128xf32> to vector<8x128xf32>
    %152 = arith.addf %150, %151 : vector<8x128xf32>
    %153 = vector.extract_strided_slice %152 {offsets = [0, 0], sizes = [8, 32], strides = [1, 1]} : vector<8x128xf32> to vector<8x32xf32>
    %154 = vector.extract_strided_slice %152 {offsets = [0, 32], sizes = [8, 32], strides = [1, 1]} : vector<8x128xf32> to vector<8x32xf32>
    %155 = vector.extract_strided_slice %152 {offsets = [0, 64], sizes = [8, 32], strides = [1, 1]} : vector<8x128xf32> to vector<8x32xf32>
    %156 = vector.extract_strided_slice %152 {offsets = [0, 96], sizes = [8, 32], strides = [1, 1]} : vector<8x128xf32> to vector<8x32xf32>
    %157 = arith.mulf %154, %139 : vector<8x32xf32>
    %158 = arith.mulf %153, %156 : vector<8x32xf32>
    %159 = arith.addf %157, %158 : vector<8x32xf32>
    %160 = math.tanh %159 : vector<8x32xf32>
    %161 = arith.mulf %155, %160 : vector<8x32xf32>
    %c7_i32 = arith.constant 7 : i32
    %c8_i32_37 = arith.constant 8 : i32
    %162 = arith.muli %c7_i32, %c8_i32_37 : i32
    %163 = tpu.assume_multiple %162, 8 : i32
    %164 = arith.index_cast %163 : i32 to index
    %c0_38 = arith.constant 0 : index
    %165 = vector.load %arg8[%164, %c0_38] : memref<64x128xf32, #tpu.memory_space<vmem>>, vector<8x128xf32>
    %cst_39 = arith.constant dense<0.000000e+00> : vector<8x128xf32>
    %166 = tpu.matmul %161, %8, %cst_39 {dimension_numbers = #tpu.dot_dimension_numbers<[1], [0], [0], [1], [0, 0, 1, 1], [], []>} : vector<8x32xf32>, vector<32x128xf32>, vector<8x128xf32> -> vector<8x128xf32>
    %167 = arith.addf %165, %166 : vector<8x128xf32>
    %168 = math.tanh %167 : vector<8x128xf32>
    %169 = vector.broadcast %14 : vector<1x128xf32> to vector<8x128xf32>
    %170 = arith.mulf %168, %169 : vector<8x128xf32>
    %171 = vector.broadcast %19 : vector<1x128xf32> to vector<8x128xf32>
    %172 = arith.addf %170, %171 : vector<8x128xf32>
    %173 = vector.extract_strided_slice %172 {offsets = [0, 0], sizes = [8, 32], strides = [1, 1]} : vector<8x128xf32> to vector<8x32xf32>
    %174 = vector.extract_strided_slice %172 {offsets = [0, 32], sizes = [8, 32], strides = [1, 1]} : vector<8x128xf32> to vector<8x32xf32>
    %175 = vector.extract_strided_slice %172 {offsets = [0, 64], sizes = [8, 32], strides = [1, 1]} : vector<8x128xf32> to vector<8x32xf32>
    %176 = vector.extract_strided_slice %172 {offsets = [0, 96], sizes = [8, 32], strides = [1, 1]} : vector<8x128xf32> to vector<8x32xf32>
    %177 = arith.mulf %174, %159 : vector<8x32xf32>
    %178 = arith.mulf %173, %176 : vector<8x32xf32>
    %179 = arith.addf %177, %178 : vector<8x32xf32>
    %180 = math.tanh %179 : vector<8x32xf32>
    %181 = arith.mulf %175, %180 : vector<8x32xf32>
    %c8_i32_40 = arith.constant 8 : i32
    %c0_41 = arith.constant 0 : index
    %c0_42 = arith.constant 0 : index
    %182 = vector.load %arg5[%c0_41, %c0_42] : memref<32x128xf32, #tpu.memory_space<vmem>>, vector<32x128xf32>
    %cst_43 = arith.constant dense<0.000000e+00> : vector<8x128xf32>
    %183 = tpu.matmul %181, %182, %cst_43 {dimension_numbers = #tpu.dot_dimension_numbers<[1], [0], [0], [1], [0, 0, 1, 1], [], []>} : vector<8x32xf32>, vector<32x128xf32>, vector<8x128xf32> -> vector<8x128xf32>
    %c0_44 = arith.constant 0 : index
    %c0_45 = arith.constant 0 : index
    %184 = vector.load %arg6[%c0_44, %c0_45] : memref<1x128xf32, #tpu.memory_space<vmem>>, vector<1x128xf32>
    %185 = vector.broadcast %184 : vector<1x128xf32> to vector<8x128xf32>
    %186 = arith.addf %183, %185 : vector<8x128xf32>
    %c0_46 = arith.constant 0 : index
    %c0_47 = arith.constant 0 : index
    %187 = vector.load %arg7[%c0_46, %c0_47] : memref<8x128xf32, #tpu.memory_space<vmem>>, vector<8x128xf32>
    tpu.vector_store %arg7[%c0_46, %c0_47], %186 {strides = array<i32>} : memref<8x128xf32, #tpu.memory_space<vmem>>, vector<8x128xf32>,
    return
  }
  func.func @transform_0(%arg0: i32) -> (i32, i32, i32) {
    %c0_i32 = arith.constant 0 : i32
    %c0_i32_0 = arith.constant 0 : i32
    %c0_i32_1 = arith.constant 0 : i32
    return %arg0, %c0_i32, %c0_i32_0 : i32, i32, i32
  }
  func.func @transform_1(%arg0: i32) -> (i32, i32) {
    %c0_i32 = arith.constant 0 : i32
    %c0_i32_0 = arith.constant 0 : i32
    %c0_i32_1 = arith.constant 0 : i32
    return %c0_i32, %c0_i32_0 : i32, i32
  }
  func.func @transform_2(%arg0: i32) -> (i32, i32) {
    %c0_i32 = arith.constant 0 : i32
    %c0_i32_0 = arith.constant 0 : i32
    %c0_i32_1 = arith.constant 0 : i32
    return %c0_i32, %c0_i32_0 : i32, i32
  }
  func.func @transform_3(%arg0: i32) -> (i32, i32) {
    %c0_i32 = arith.constant 0 : i32
    %c0_i32_0 = arith.constant 0 : i32
    %c0_i32_1 = arith.constant 0 : i32
    return %c0_i32, %c0_i32_0 : i32, i32
  }
  func.func @transform_4(%arg0: i32) -> (i32, i32) {
    %c0_i32 = arith.constant 0 : i32
    %c0_i32_0 = arith.constant 0 : i32
    %c0_i32_1 = arith.constant 0 : i32
    return %c0_i32, %c0_i32_0 : i32, i32
  }
  func.func @transform_5(%arg0: i32) -> (i32, i32) {
    %c0_i32 = arith.constant 0 : i32
    %c0_i32_0 = arith.constant 0 : i32
    %c0_i32_1 = arith.constant 0 : i32
    return %c0_i32, %c0_i32_0 : i32, i32
  }
  func.func @transform_6(%arg0: i32) -> (i32, i32) {
    %c0_i32 = arith.constant 0 : i32
    %c0_i32_0 = arith.constant 0 : i32
    return %arg0, %c0_i32 : i32, i32
  }
}

</mosaic_0001>

<llo_original>
// kernel: lstm_variational_encoder.1
$region0: #{lstm_variational_encoder.1}
  #allocation0 [shape = 'u32[]', space=smem, size = 0x4, offset = 0x4, fixed_abs, tag = 'smem constant byte address 0x4 - core index']
  #allocation1 [shape = 'u32[144,128]{1,0:T(1,128)}', space=vmem, size = 0x12000, scoped, tag = 'internal scratch']
  #allocation2 [shape = 'f32[64,128]{1,0:T(8,128)}', space=vmem, size = 0x8000, scoped, tag = 'scratch operand']
  %s0 = inlined_call_operand.vmem [shape: f32[1,64,16], index: 0, kind: input, shape index: {}]
  %s1 = inlined_call_operand.vmem [shape: f32[16,128], index: 1, kind: input, shape index: {}]
  %s2 = inlined_call_operand.vmem [shape: f32[32,128], index: 2, kind: input, shape index: {}]
  %s3 = inlined_call_operand.vmem [shape: f32[1,128], index: 3, kind: input, shape index: {}]
  %s4 = inlined_call_operand.vmem [shape: f32[32,128], index: 4, kind: input, shape index: {}]
  %s5 = inlined_call_operand.vmem [shape: f32[1,128], index: 5, kind: input, shape index: {}]
  %s6 = inlined_call_operand.vmem [shape: f32[8,128], index: 6, kind: output, shape index: {}]
  %s7 = sld [smem:[#allocation0]]
  $region34: #{lstm_variational_encoder.1} parent=0
    _
  %s9 = ssub.s32 1, %s7
  %s10 = scalar_select 0, %s9, %s7
  // Predicated region
  $region2: #{lstm_variational_encoder.1} parent=0 // pred_check
    _
  $region3: #{lstm_variational_encoder.1} parent=0 // pred_check_branch
    %12 = sbr.rel (0) target = $region5
  $region4: #{lstm_variational_encoder.1} parent=0 // pred_region
    _
  $region5: #{lstm_variational_encoder.1} parent=0 // pred_fallthru
    _
  // Predicated region
  $region6: #{lstm_variational_encoder.1} parent=0 // pred_check
    _
  $region7: #{lstm_variational_encoder.1} parent=0 // pred_check_branch
    %14 = sbr.rel (0) target = $region9
  $region8: #{lstm_variational_encoder.1} parent=0 // pred_region
    _
  $region9: #{lstm_variational_encoder.1} parent=0 // pred_fallthru
    _
  // Predicated region
  $region10: #{lstm_variational_encoder.1} parent=0 // pred_check
    _
  $region11: #{lstm_variational_encoder.1} parent=0 // pred_check_branch
    %16 = sbr.rel (0) target = $region13
  $region12: #{lstm_variational_encoder.1} parent=0 // pred_region
    _
  $region13: #{lstm_variational_encoder.1} parent=0 // pred_fallthru
    _
  // Predicated region
  $region14: #{lstm_variational_encoder.1} parent=0 // pred_check
    _
  $region15: #{lstm_variational_encoder.1} parent=0 // pred_check_branch
    %18 = sbr.rel (0) target = $region17
  $region16: #{lstm_variational_encoder.1} parent=0 // pred_region
    _
  $region17: #{lstm_variational_encoder.1} parent=0 // pred_fallthru
    _
  // Predicated region
  $region18: #{lstm_variational_encoder.1} parent=0 // pred_check
    _
  $region19: #{lstm_variational_encoder.1} parent=0 // pred_check_branch
    %20 = sbr.rel (0) target = $region21
  $region20: #{lstm_variational_encoder.1} parent=0 // pred_region
    _
  $region21: #{lstm_variational_encoder.1} parent=0 // pred_fallthru
    _
  // Predicated region
  $region22: #{lstm_variational_encoder.1} parent=0 // pred_check
    _
  $region23: #{lstm_variational_encoder.1} parent=0 // pred_check_branch
    %22 = sbr.rel (0) target = $region25
  $region24: #{lstm_variational_encoder.1} parent=0 // pred_region
    _
  $region25: #{lstm_variational_encoder.1} parent=0 // pred_fallthru
    _
  %v23 = vld [vmem:[%s0] sm:$0xff]
  %v24 = vld [vmem:[%s0 + $0x8] sm:$0xff]
  %v25 = vld [vmem:[%s0 + $0x10] sm:$0xff]
  %v26 = vld [vmem:[%s0 + $0x18] sm:$0xff]
  %v27 = vld [vmem:[%s0 + $0x20] sm:$0xff]
  %v28 = vld [vmem:[%s0 + $0x28] sm:$0xff]
  %v29 = vld [vmem:[%s0 + $0x30] sm:$0xff]
  %v30 = vld [vmem:[%s0 + $0x38] sm:$0xff]
  %v31 = vld [vmem:[%s1] sm:$0xff]
  %v32 = vld [vmem:[%s1 + $0x8] sm:$0xff]
  %v33 = vld [vmem:[%s3] sm:$0x1]
  %v35 = vlaneseq
  %v36 = vshrl.u32 %v35, 7
  %v37 = vsub.s32 0, %v36
  %v38 = vrot.slane %v33, %v37
  %vm40 = vcmask 130048
  %v42 = vsel %vm40, %v23, 0
  %v45 = vsel %vm40, %v24, 0
  %v48 = vsel %vm40, %v25, 0
  %v51 = vsel %vm40, %v26, 0
  %v54 = vsel %vm40, %v27, 0
  %v57 = vsel %vm40, %v28, 0
  %v60 = vsel %vm40, %v29, 0
  %v63 = vsel %vm40, %v30, 0
  %65 = vmatprep.subr.mxu0 0.0
  %66 = vmatpush1.msra.mxu0 %v31
  %67 = vmatprep.subr.mxu0 0.0
  %68 = vmatpush1.msra.mxu0 %v32
  %69 = vmatprep.subr.mxu0 0.0
  %70 = vmatpush1.msra.mxu0 0.0
  %71 = vmatprep.subr.mxu0 0.0
  %72 = vmatpush1.msra.mxu0 0.0
  %73 = vmatprep.subr.mxu0 0.0
  %74 = vmatpush1.msra.mxu0 0.0
  %75 = vmatprep.subr.mxu0 0.0
  %76 = vmatpush1.msra.mxu0 0.0
  %77 = vmatprep.subr.mxu0 0.0
  %78 = vmatpush1.msra.mxu0 0.0
  %79 = vmatprep.subr.mxu0 0.0
  %80 = vmatpush1.msra.mxu0 0.0
  %81 = vmatprep.subr.mxu0 0.0
  %82 = vmatpush1.msra.mxu0 0.0
  %83 = vmatprep.subr.mxu0 0.0
  %84 = vmatpush1.msra.mxu0 0.0
  %85 = vmatprep.subr.mxu0 0.0
  %86 = vmatpush1.msra.mxu0 0.0
  %87 = vmatprep.subr.mxu0 0.0
  %88 = vmatpush1.msra.mxu0 0.0
  %89 = vmatprep.subr.mxu0 0.0
  %90 = vmatpush1.msra.mxu0 0.0
  %91 = vmatprep.subr.mxu0 0.0
  %92 = vmatpush1.msra.mxu0 0.0
  %93 = vmatprep.subr.mxu0 0.0
  %94 = vmatpush1.msra.mxu0 0.0
  %95 = vmatprep.subr.mxu0 0.0
  %96 = vmatpush1.msra.mxu0 0.0
  %97 = vmatprep.subr.mxu0 0.0
  %98 = vmatpush1.msra.mxu0 0.0
  %99 = vmatprep.subr.mxu0 0.0
  %100 = vmatpush1.msra.mxu0 0.0
  %101 = vmatprep.subr.mxu0 0.0
  %102 = vmatpush1.msra.mxu0 0.0
  %103 = vmatprep.subr.mxu0 0.0
  %104 = vmatpush1.msra.mxu0 0.0
  %105 = vmatprep.subr.mxu0 0.0
  %106 = vmatpush1.msra.mxu0 0.0
  %107 = vmatprep.subr.mxu0 0.0
  %108 = vmatpush1.msra.mxu0 0.0
  %109 = vmatprep.subr.mxu0 0.0
  %110 = vmatpush1.msra.mxu0 0.0
  %111 = vmatprep.subr.mxu0 0.0
  %112 = vmatpush1.msra.mxu0 0.0
  %113 = vmatprep.subr.mxu0 0.0
  %114 = vmatpush1.msra.mxu0 0.0
  %115 = vmatprep.subr.mxu0 0.0
  %116 = vmatpush1.msra.mxu0 0.0
  %117 = vmatprep.subr.mxu0 0.0
  %118 = vmatpush1.msra.mxu0 0.0
  %119 = vmatprep.subr.mxu0 0.0
  %120 = vmatpush1.msra.mxu0 0.0
  %121 = vmatprep.subr.mxu0 0.0
  %122 = vmatpush1.msra.mxu0 0.0
  %123 = vmatprep.subr.mxu0 0.0
  %124 = vmatpush1.msra.mxu0 0.0
  %125 = vmatprep.subr.mxu0 0.0
  %126 = vmatpush1.msra.mxu0 0.0
  %127 = vmatprep.subr.mxu0 0.0
  %128 = vmatpush1.msra.mxu0 0.0
  %129 = vmatprep.mubr.f32.mxu0 0.0
  %130 = vmatmul.mubr.f32.gmra.mrb[0].mxu0 %v42
  %v131 = vpop.f32.mrb[0].mxu0
  %v132 = vadd.f32 %v38, %v131
  %v133 = vpop.f32.mrb[0].mxu0
  %134 = vmatprep.mubr.f32.mxu0 0.0
  %135 = vmatmul.mubr.f32.gmra.mrb[0].mxu0 %v45
  %v136 = vpop.f32.mrb[0].mxu0
  %v137 = vadd.f32 %v38, %v136
  %v138 = vpop.f32.mrb[0].mxu0
  %139 = vmatprep.mubr.f32.mxu0 0.0
  %140 = vmatmul.mubr.f32.gmra.mrb[0].mxu0 %v48
  %v141 = vpop.f32.mrb[0].mxu0
  %v142 = vadd.f32 %v38, %v141
  %v143 = vpop.f32.mrb[0].mxu0
  %144 = vmatprep.mubr.f32.mxu0 0.0
  %145 = vmatmul.mubr.f32.gmra.mrb[0].mxu0 %v51
  %v146 = vpop.f32.mrb[0].mxu0
  %v147 = vadd.f32 %v38, %v146
  %v148 = vpop.f32.mrb[0].mxu0
  %149 = vmatprep.mubr.f32.mxu0 0.0
  %150 = vmatmul.mubr.f32.gmra.mrb[0].mxu0 %v54
  %v151 = vpop.f32.mrb[0].mxu0
  %v152 = vadd.f32 %v38, %v151
  %v153 = vpop.f32.mrb[0].mxu0
  %154 = vmatprep.mubr.f32.mxu0 0.0
  %155 = vmatmul.mubr.f32.gmra.mrb[0].mxu0 %v57
  %v156 = vpop.f32.mrb[0].mxu0
  %v157 = vadd.f32 %v38, %v156
  %v158 = vpop.f32.mrb[0].mxu0
  %159 = vmatprep.mubr.f32.mxu0 0.0
  %160 = vmatmul.mubr.f32.gmra.mrb[0].mxu0 %v60
  %v161 = vpop.f32.mrb[0].mxu0
  %v162 = vadd.f32 %v38, %v161
  %v163 = vpop.f32.mrb[0].mxu0
  %164 = vmatprep.mubr.f32.mxu0 0.0
  %165 = vmatmul.mubr.f32.gmra.mrb[0].mxu0 %v63
  %v166 = vpop.f32.mrb[0].mxu0
  %v167 = vadd.f32 %v38, %v166
  %v168 = vpop.f32.mrb[0].mxu0
  %169 = vdwg.mxu0
  %170 = vst [vmem:[#allocation2] sm:$0xff] %v132
  %171 = vst [vmem:[#allocation2 + $0x8] sm:$0xff] %v137
  %172 = vst [vmem:[#allocation2 + $0x10] sm:$0xff] %v142
  %173 = vst [vmem:[#allocation2 + $0x18] sm:$0xff] %v147
  %174 = vst [vmem:[#allocation2 + $0x20] sm:$0xff] %v152
  %175 = vst [vmem:[#allocation2 + $0x28] sm:$0xff] %v157
  %176 = vst [vmem:[#allocation2 + $0x30] sm:$0xff] %v162
  %177 = vst [vmem:[#allocation2 + $0x38] sm:$0xff] %v167
  %v178 = vld [vmem:[%s2] sm:$0xff]
  %v179 = vld [vmem:[%s2 + $0x8] sm:$0xff]
  %v180 = vld [vmem:[%s2 + $0x10] sm:$0xff]
  %v181 = vld [vmem:[%s2 + $0x18] sm:$0xff]
  %v182 = vlaneseq
  %v183 = vand.u32 %v182, 127
  %vm184 = vcmp.lt.s32.totalorder %v183, 96
  %v185 = vsel %vm184, 0.5, 1.0
  %v186 = vsel %vm184, 0.5, 0.0
  %v187 = vld [vmem:[#allocation2] sm:$0xff]
  %vm188 = vcmask 261120
  %v190 = vsel %vm188, 0.0, 0
  %192 = vmatprep.subr.mxu0 0.0
  %193 = vmatpush1.msra.mxu0 %v178
  %194 = vmatprep.subr.mxu0 0.0
  %195 = vmatpush1.msra.mxu0 %v179
  %196 = vmatprep.subr.mxu0 0.0
  %197 = vmatpush1.msra.mxu0 %v180
  %198 = vmatprep.subr.mxu0 0.0
  %199 = vmatpush1.msra.mxu0 %v181
  %200 = vmatprep.subr.mxu0 0.0
  %201 = vmatpush1.msra.mxu0 0.0
  %202 = vmatprep.subr.mxu0 0.0
  %203 = vmatpush1.msra.mxu0 0.0
  %204 = vmatprep.subr.mxu0 0.0
  %205 = vmatpush1.msra.mxu0 0.0
  %206 = vmatprep.subr.mxu0 0.0
  %207 = vmatpush1.msra.mxu0 0.0
  %208 = vmatprep.subr.mxu0 0.0
  %209 = vmatpush1.msra.mxu0 0.0
  %210 = vmatprep.subr.mxu0 0.0
  %211 = vmatpush1.msra.mxu0 0.0
  %212 = vmatprep.subr.mxu0 0.0
  %213 = vmatpush1.msra.mxu0 0.0
  %214 = vmatprep.subr.mxu0 0.0
  %215 = vmatpush1.msra.mxu0 0.0
  %216 = vmatprep.subr.mxu0 0.0
  %217 = vmatpush1.msra.mxu0 0.0
  %218 = vmatprep.subr.mxu0 0.0
  %219 = vmatpush1.msra.mxu0 0.0
  %220 = vmatprep.subr.mxu0 0.0
  %221 = vmatpush1.msra.mxu0 0.0
  %222 = vmatprep.subr.mxu0 0.0
  %223 = vmatpush1.msra.mxu0 0.0
  %224 = vmatprep.subr.mxu0 0.0
  %225 = vmatpush1.msra.mxu0 0.0
  %226 = vmatprep.subr.mxu0 0.0
  %227 = vmatpush1.msra.mxu0 0.0
  %228 = vmatprep.subr.mxu0 0.0
  %229 = vmatpush1.msra.mxu0 0.0
  %230 = vmatprep.subr.mxu0 0.0
  %231 = vmatpush1.msra.mxu0 0.0
  %232 = vmatprep.subr.mxu0 0.0
  %233 = vmatpush1.msra.mxu0 0.0
  %234 = vmatprep.subr.mxu0 0.0
  %235 = vmatpush1.msra.mxu0 0.0
  %236 = vmatprep.subr.mxu0 0.0
  %237 = vmatpush1.msra.mxu0 0.0
  %238 = vmatprep.subr.mxu0 0.0
  %239 = vmatpush1.msra.mxu0 0.0
  %240 = vmatprep.subr.mxu0 0.0
  %241 = vmatpush1.msra.mxu0 0.0
  %242 = vmatprep.subr.mxu0 0.0
  %243 = vmatpush1.msra.mxu0 0.0
  %244 = vmatprep.subr.mxu0 0.0
  %245 = vmatpush1.msra.mxu0 0.0
  %246 = vmatprep.subr.mxu0 0.0
  %247 = vmatpush1.msra.mxu0 0.0
  %248 = vmatprep.subr.mxu0 0.0
  %249 = vmatpush1.msra.mxu0 0.0
  %250 = vmatprep.subr.mxu0 0.0
  %251 = vmatpush1.msra.mxu0 0.0
  %252 = vmatprep.subr.mxu0 0.0
  %253 = vmatpush1.msra.mxu0 0.0
  %254 = vmatprep.subr.mxu0 0.0
  %255 = vmatpush1.msra.mxu0 0.0
  %256 = vmatprep.mubr.f32.mxu0 0.0
  %257 = vmatmul.mubr.f32.gmra.mrb[0].mxu0 %v190
  %v258 = vpop.f32.mrb[0].mxu0
  %v259 = vadd.f32 0.0, %v258
  %v260 = vpop.f32.mrb[0].mxu0
  %261 = vdwg.mxu0
  %v262 = vadd.f32 %v187, %v259
  %v263 = vtanh.pop %v262
  %v264 = vmul.f32 %v263, %v185
  %v265 = vadd.f32 %v264, %v186
  %v266 = vmul.f32 %v265, 0.0
  %268 = vrot.lane.b32.xlu0 %v265, 32
  %v269 = vpop.permute.xlu0 %268
  %v271 = vmul.f32 %v265, %v269
  %273 = vrot.lane.b32.xlu0 %v271, 32
  %v274 = vpop.permute.xlu0 %273
  %v276 = vadd.f32 %v266, %v274
  %v277 = vtanh.pop %v276
  %279 = vrot.lane.b32.xlu0 %v277, 32
  %v280 = vpop.permute.xlu0 %279
  %v282 = vmul.f32 %v265, %v280
  %s283 = scalar_lea.vmem [#allocation2], 8
  %v284 = vld [vmem:[%s283] sm:$0xff]
  %286 = vrot.lane.b32.xlu0 %v282, 64
  %v287 = vpop.permute.xlu0 %286
  %v288 = vsel %vm188, %v287, 0
  %290 = vmatprep.subr.mxu0 0.0
  %291 = vmatpush1.msra.mxu0 %v178
  %292 = vmatprep.subr.mxu0 0.0
  %293 = vmatpush1.msra.mxu0 %v179
  %294 = vmatprep.subr.mxu0 0.0
  %295 = vmatpush1.msra.mxu0 %v180
  %296 = vmatprep.subr.mxu0 0.0
  %297 = vmatpush1.msra.mxu0 %v181
  %298 = vmatprep.subr.mxu0 0.0
  %299 = vmatpush1.msra.mxu0 0.0
  %300 = vmatprep.subr.mxu0 0.0
  %301 = vmatpush1.msra.mxu0 0.0
  %302 = vmatprep.subr.mxu0 0.0
  %303 = vmatpush1.msra.mxu0 0.0
  %304 = vmatprep.subr.mxu0 0.0
  %305 = vmatpush1.msra.mxu0 0.0
  %306 = vmatprep.subr.mxu0 0.0
  %307 = vmatpush1.msra.mxu0 0.0
  %308 = vmatprep.subr.mxu0 0.0
  %309 = vmatpush1.msra.mxu0 0.0
  %310 = vmatprep.subr.mxu0 0.0
  %311 = vmatpush1.msra.mxu0 0.0
  %312 = vmatprep.subr.mxu0 0.0
  %313 = vmatpush1.msra.mxu0 0.0
  %314 = vmatprep.subr.mxu0 0.0
  %315 = vmatpush1.msra.mxu0 0.0
  %316 = vmatprep.subr.mxu0 0.0
  %317 = vmatpush1.msra.mxu0 0.0
  %318 = vmatprep.subr.mxu0 0.0
  %319 = vmatpush1.msra.mxu0 0.0
  %320 = vmatprep.subr.mxu0 0.0
  %321 = vmatpush1.msra.mxu0 0.0
  %322 = vmatprep.subr.mxu0 0.0
  %323 = vmatpush1.msra.mxu0 0.0
  %324 = vmatprep.subr.mxu0 0.0
  %325 = vmatpush1.msra.mxu0 0.0
  %326 = vmatprep.subr.mxu0 0.0
  %327 = vmatpush1.msra.mxu0 0.0
  %328 = vmatprep.subr.mxu0 0.0
  %329 = vmatpush1.msra.mxu0 0.0
  %330 = vmatprep.subr.mxu0 0.0
  %331 = vmatpush1.msra.mxu0 0.0
  %332 = vmatprep.subr.mxu0 0.0
  %333 = vmatpush1.msra.mxu0 0.0
  %334 = vmatprep.subr.mxu0 0.0
  %335 = vmatpush1.msra.mxu0 0.0
  %336 = vmatprep.subr.mxu0 0.0
  %337 = vmatpush1.msra.mxu0 0.0
  %338 = vmatprep.subr.mxu0 0.0
  %339 = vmatpush1.msra.mxu0 0.0
  %340 = vmatprep.subr.mxu0 0.0
  %341 = vmatpush1.msra.mxu0 0.0
  %342 = vmatprep.subr.mxu0 0.0
  %343 = vmatpush1.msra.mxu0 0.0
  %344 = vmatprep.subr.mxu0 0.0
  %345 = vmatpush1.msra.mxu0 0.0
  %346 = vmatprep.subr.mxu0 0.0
  %347 = vmatpush1.msra.mxu0 0.0
  %348 = vmatprep.subr.mxu0 0.0
  %349 = vmatpush1.msra.mxu0 0.0
  %350 = vmatprep.subr.mxu0 0.0
  %351 = vmatpush1.msra.mxu0 0.0
  %352 = vmatprep.subr.mxu0 0.0
  %353 = vmatpush1.msra.mxu0 0.0
  %354 = vmatprep.mubr.f32.mxu0 0.0
  %355 = vmatmul.mubr.f32.gmra.mrb[0].mxu0 %v288
  %v356 = vpop.f32.mrb[0].mxu0
  %v357 = vadd.f32 0.0, %v356
  %v358 = vpop.f32.mrb[0].mxu0
  %359 = vdwg.mxu0
  %v360 = vadd.f32 %v284, %v357
  %v361 = vtanh.pop %v360
  %v362 = vmul.f32 %v361, %v185
  %v363 = vadd.f32 %v362, %v186
  %v364 = vmul.f32 %v363, %v276
  %366 = vrot.lane.b32.xlu0 %v363, 32
  %v367 = vpop.permute.xlu0 %366
  %v369 = vmul.f32 %v363, %v367
  %371 = vrot.lane.b32.xlu0 %v369, 32
  %v372 = vpop.permute.xlu0 %371
  %v374 = vadd.f32 %v364, %v372
  %v375 = vtanh.pop %v374
  %377 = vrot.lane.b32.xlu0 %v375, 32
  %v378 = vpop.permute.xlu0 %377
  %v380 = vmul.f32 %v363, %v378
  %s381 = scalar_lea.vmem [#allocation2], 16
  %v382 = vld [vmem:[%s381] sm:$0xff]
  %384 = vrot.lane.b32.xlu0 %v380, 64
  %v385 = vpop.permute.xlu0 %384
  %v386 = vsel %vm188, %v385, 0
  %388 = vmatprep.subr.mxu0 0.0
  %389 = vmatpush1.msra.mxu0 %v178
  %390 = vmatprep.subr.mxu0 0.0
  %391 = vmatpush1.msra.mxu0 %v179
  %392 = vmatprep.subr.mxu0 0.0
  %393 = vmatpush1.msra.mxu0 %v180
  %394 = vmatprep.subr.mxu0 0.0
  %395 = vmatpush1.msra.mxu0 %v181
  %396 = vmatprep.subr.mxu0 0.0
  %397 = vmatpush1.msra.mxu0 0.0
  %398 = vmatprep.subr.mxu0 0.0
  %399 = vmatpush1.msra.mxu0 0.0
  %400 = vmatprep.subr.mxu0 0.0
  %401 = vmatpush1.msra.mxu0 0.0
  %402 = vmatprep.subr.mxu0 0.0
  %403 = vmatpush1.msra.mxu0 0.0
  %404 = vmatprep.subr.mxu0 0.0
  %405 = vmatpush1.msra.mxu0 0.0
  %406 = vmatprep.subr.mxu0 0.0
  %407 = vmatpush1.msra.mxu0 0.0
  %408 = vmatprep.subr.mxu0 0.0
  %409 = vmatpush1.msra.mxu0 0.0
  %410 = vmatprep.subr.mxu0 0.0
  %411 = vmatpush1.msra.mxu0 0.0
  %412 = vmatprep.subr.mxu0 0.0
  %413 = vmatpush1.msra.mxu0 0.0
  %414 = vmatprep.subr.mxu0 0.0
  %415 = vmatpush1.msra.mxu0 0.0
  %416 = vmatprep.subr.mxu0 0.0
  %417 = vmatpush1.msra.mxu0 0.0
  %418 = vmatprep.subr.mxu0 0.0
  %419 = vmatpush1.msra.mxu0 0.0
  %420 = vmatprep.subr.mxu0 0.0
  %421 = vmatpush1.msra.mxu0 0.0
  %422 = vmatprep.subr.mxu0 0.0
  %423 = vmatpush1.msra.mxu0 0.0
  %424 = vmatprep.subr.mxu0 0.0
  %425 = vmatpush1.msra.mxu0 0.0
  %426 = vmatprep.subr.mxu0 0.0
  %427 = vmatpush1.msra.mxu0 0.0
  %428 = vmatprep.subr.mxu0 0.0
  %429 = vmatpush1.msra.mxu0 0.0
  %430 = vmatprep.subr.mxu0 0.0
  %431 = vmatpush1.msra.mxu0 0.0
  %432 = vmatprep.subr.mxu0 0.0
  %433 = vmatpush1.msra.mxu0 0.0
  %434 = vmatprep.subr.mxu0 0.0
  %435 = vmatpush1.msra.mxu0 0.0
  %436 = vmatprep.subr.mxu0 0.0
  %437 = vmatpush1.msra.mxu0 0.0
  %438 = vmatprep.subr.mxu0 0.0
  %439 = vmatpush1.msra.mxu0 0.0
  %440 = vmatprep.subr.mxu0 0.0
  %441 = vmatpush1.msra.mxu0 0.0
  %442 = vmatprep.subr.mxu0 0.0
  %443 = vmatpush1.msra.mxu0 0.0
  %444 = vmatprep.subr.mxu0 0.0
  %445 = vmatpush1.msra.mxu0 0.0
  %446 = vmatprep.subr.mxu0 0.0
  %447 = vmatpush1.msra.mxu0 0.0
  %448 = vmatprep.subr.mxu0 0.0
  %449 = vmatpush1.msra.mxu0 0.0
  %450 = vmatprep.subr.mxu0 0.0
  %451 = vmatpush1.msra.mxu0 0.0
  %452 = vmatprep.mubr.f32.mxu0 0.0
  %453 = vmatmul.mubr.f32.gmra.mrb[0].mxu0 %v386
  %v454 = vpop.f32.mrb[0].mxu0
  %v455 = vadd.f32 0.0, %v454
  %v456 = vpop.f32.mrb[0].mxu0
  %457 = vdwg.mxu0
  %v458 = vadd.f32 %v382, %v455
  %v459 = vtanh.pop %v458
  %v460 = vmul.f32 %v459, %v185
  %v461 = vadd.f32 %v460, %v186
  %v462 = vmul.f32 %v461, %v374
  %464 = vrot.lane.b32.xlu0 %v461, 32
  %v465 = vpop.permute.xlu0 %464
  %v467 = vmul.f32 %v461, %v465
  %469 = vrot.lane.b32.xlu0 %v467, 32
  %v470 = vpop.permute.xlu0 %469
  %v472 = vadd.f32 %v462, %v470
  %v473 = vtanh.pop %v472
  %475 = vrot.lane.b32.xlu0 %v473, 32
  %v476 = vpop.permute.xlu0 %475
  %v478 = vmul.f32 %v461, %v476
  %s479 = scalar_lea.vmem [#allocation2], 24
  %v480 = vld [vmem:[%s479] sm:$0xff]
  %482 = vrot.lane.b32.xlu0 %v478, 64
  %v483 = vpop.permute.xlu0 %482
  %v484 = vsel %vm188, %v483, 0
  %486 = vmatprep.subr.mxu0 0.0
  %487 = vmatpush1.msra.mxu0 %v178
  %488 = vmatprep.subr.mxu0 0.0
  %489 = vmatpush1.msra.mxu0 %v179
  %490 = vmatprep.subr.mxu0 0.0
  %491 = vmatpush1.msra.mxu0 %v180
  %492 = vmatprep.subr.mxu0 0.0
  %493 = vmatpush1.msra.mxu0 %v181
  %494 = vmatprep.subr.mxu0 0.0
  %495 = vmatpush1.msra.mxu0 0.0
  %496 = vmatprep.subr.mxu0 0.0
  %497 = vmatpush1.msra.mxu0 0.0
  %498 = vmatprep.subr.mxu0 0.0
  %499 = vmatpush1.msra.mxu0 0.0
  %500 = vmatprep.subr.mxu0 0.0
  %501 = vmatpush1.msra.mxu0 0.0
  %502 = vmatprep.subr.mxu0 0.0
  %503 = vmatpush1.msra.mxu0 0.0
  %504 = vmatprep.subr.mxu0 0.0
  %505 = vmatpush1.msra.mxu0 0.0
  %506 = vmatprep.subr.mxu0 0.0
  %507 = vmatpush1.msra.mxu0 0.0
  %508 = vmatprep.subr.mxu0 0.0
  %509 = vmatpush1.msra.mxu0 0.0
  %510 = vmatprep.subr.mxu0 0.0
  %511 = vmatpush1.msra.mxu0 0.0
  %512 = vmatprep.subr.mxu0 0.0
  %513 = vmatpush1.msra.mxu0 0.0
  %514 = vmatprep.subr.mxu0 0.0
  %515 = vmatpush1.msra.mxu0 0.0
  %516 = vmatprep.subr.mxu0 0.0
  %517 = vmatpush1.msra.mxu0 0.0
  %518 = vmatprep.subr.mxu0 0.0
  %519 = vmatpush1.msra.mxu0 0.0
  %520 = vmatprep.subr.mxu0 0.0
  %521 = vmatpush1.msra.mxu0 0.0
  %522 = vmatprep.subr.mxu0 0.0
  %523 = vmatpush1.msra.mxu0 0.0
  %524 = vmatprep.subr.mxu0 0.0
  %525 = vmatpush1.msra.mxu0 0.0
  %526 = vmatprep.subr.mxu0 0.0
  %527 = vmatpush1.msra.mxu0 0.0
  %528 = vmatprep.subr.mxu0 0.0
  %529 = vmatpush1.msra.mxu0 0.0
  %530 = vmatprep.subr.mxu0 0.0
  %531 = vmatpush1.msra.mxu0 0.0
  %532 = vmatprep.subr.mxu0 0.0
  %533 = vmatpush1.msra.mxu0 0.0
  %534 = vmatprep.subr.mxu0 0.0
  %535 = vmatpush1.msra.mxu0 0.0
  %536 = vmatprep.subr.mxu0 0.0
  %537 = vmatpush1.msra.mxu0 0.0
  %538 = vmatprep.subr.mxu0 0.0
  %539 = vmatpush1.msra.mxu0 0.0
  %540 = vmatprep.subr.mxu0 0.0
  %541 = vmatpush1.msra.mxu0 0.0
  %542 = vmatprep.subr.mxu0 0.0
  %543 = vmatpush1.msra.mxu0 0.0
  %544 = vmatprep.subr.mxu0 0.0
  %545 = vmatpush1.msra.mxu0 0.0
  %546 = vmatprep.subr.mxu0 0.0
  %547 = vmatpush1.msra.mxu0 0.0
  %548 = vmatprep.subr.mxu0 0.0
  %549 = vmatpush1.msra.mxu0 0.0
  %550 = vmatprep.mubr.f32.mxu0 0.0
  %551 = vmatmul.mubr.f32.gmra.mrb[0].mxu0 %v484
  %v552 = vpop.f32.mrb[0].mxu0
  %v553 = vadd.f32 0.0, %v552
  %v554 = vpop.f32.mrb[0].mxu0
  %555 = vdwg.mxu0
  %v556 = vadd.f32 %v480, %v553
  %v557 = vtanh.pop %v556
  %v558 = vmul.f32 %v557, %v185
  %v559 = vadd.f32 %v558, %v186
  %v560 = vmul.f32 %v559, %v472
  %562 = vrot.lane.b32.xlu0 %v559, 32
  %v563 = vpop.permute.xlu0 %562
  %v565 = vmul.f32 %v559, %v563
  %567 = vrot.lane.b32.xlu0 %v565, 32
  %v568 = vpop.permute.xlu0 %567
  %v570 = vadd.f32 %v560, %v568
  %v571 = vtanh.pop %v570
  %573 = vrot.lane.b32.xlu0 %v571, 32
  %v574 = vpop.permute.xlu0 %573
  %v576 = vmul.f32 %v559, %v574
  %s577 = scalar_lea.vmem [#allocation2], 32
  %v578 = vld [vmem:[%s577] sm:$0xff]
  %580 = vrot.lane.b32.xlu0 %v576, 64
  %v581 = vpop.permute.xlu0 %580
  %v582 = vsel %vm188, %v581, 0
  %584 = vmatprep.subr.mxu0 0.0
  %585 = vmatpush1.msra.mxu0 %v178
  %586 = vmatprep.subr.mxu0 0.0
  %587 = vmatpush1.msra.mxu0 %v179
  %588 = vmatprep.subr.mxu0 0.0
  %589 = vmatpush1.msra.mxu0 %v180
  %590 = vmatprep.subr.mxu0 0.0
  %591 = vmatpush1.msra.mxu0 %v181
  %592 = vmatprep.subr.mxu0 0.0
  %593 = vmatpush1.msra.mxu0 0.0
  %594 = vmatprep.subr.mxu0 0.0
  %595 = vmatpush1.msra.mxu0 0.0
  %596 = vmatprep.subr.mxu0 0.0
  %597 = vmatpush1.msra.mxu0 0.0
  %598 = vmatprep.subr.mxu0 0.0
  %599 = vmatpush1.msra.mxu0 0.0
  %600 = vmatprep.subr.mxu0 0.0
  %601 = vmatpush1.msra.mxu0 0.0
  %602 = vmatprep.subr.mxu0 0.0
  %603 = vmatpush1.msra.mxu0 0.0
  %604 = vmatprep.subr.mxu0 0.0
  %605 = vmatpush1.msra.mxu0 0.0
  %606 = vmatprep.subr.mxu0 0.0
  %607 = vmatpush1.msra.mxu0 0.0
  %608 = vmatprep.subr.mxu0 0.0
  %609 = vmatpush1.msra.mxu0 0.0
  %610 = vmatprep.subr.mxu0 0.0
  %611 = vmatpush1.msra.mxu0 0.0
  %612 = vmatprep.subr.mxu0 0.0
  %613 = vmatpush1.msra.mxu0 0.0
  %614 = vmatprep.subr.mxu0 0.0
  %615 = vmatpush1.msra.mxu0 0.0
  %616 = vmatprep.subr.mxu0 0.0
  %617 = vmatpush1.msra.mxu0 0.0
  %618 = vmatprep.subr.mxu0 0.0
  %619 = vmatpush1.msra.mxu0 0.0
  %620 = vmatprep.subr.mxu0 0.0
  %621 = vmatpush1.msra.mxu0 0.0
  %622 = vmatprep.subr.mxu0 0.0
  %623 = vmatpush1.msra.mxu0 0.0
  %624 = vmatprep.subr.mxu0 0.0
  %625 = vmatpush1.msra.mxu0 0.0
  %626 = vmatprep.subr.mxu0 0.0
  %627 = vmatpush1.msra.mxu0 0.0
  %628 = vmatprep.subr.mxu0 0.0
  %629 = vmatpush1.msra.mxu0 0.0
  %630 = vmatprep.subr.mxu0 0.0
  %631 = vmatpush1.msra.mxu0 0.0
  %632 = vmatprep.subr.mxu0 0.0
  %633 = vmatpush1.msra.mxu0 0.0
  %634 = vmatprep.subr.mxu0 0.0
  %635 = vmatpush1.msra.mxu0 0.0
  %636 = vmatprep.subr.mxu0 0.0
  %637 = vmatpush1.msra.mxu0 0.0
  %638 = vmatprep.subr.mxu0 0.0
  %639 = vmatpush1.msra.mxu0 0.0
  %640 = vmatprep.subr.mxu0 0.0
  %641 = vmatpush1.msra.mxu0 0.0
  %642 = vmatprep.subr.mxu0 0.0
  %643 = vmatpush1.msra.mxu0 0.0
  %644 = vmatprep.subr.mxu0 0.0
  %645 = vmatpush1.msra.mxu0 0.0
  %646 = vmatprep.subr.mxu0 0.0
  %647 = vmatpush1.msra.mxu0 0.0
  %648 = vmatprep.mubr.f32.mxu0 0.0
  %649 = vmatmul.mubr.f32.gmra.mrb[0].mxu0 %v582
  %v650 = vpop.f32.mrb[0].mxu0
  %v651 = vadd.f32 0.0, %v650
  %v652 = vpop.f32.mrb[0].mxu0
  %653 = vdwg.mxu0
  %v654 = vadd.f32 %v578, %v651
  %v655 = vtanh.pop %v654
  %v656 = vmul.f32 %v655, %v185
  %v657 = vadd.f32 %v656, %v186
  %v658 = vmul.f32 %v657, %v570
  %660 = vrot.lane.b32.xlu0 %v657, 32
  %v661 = vpop.permute.xlu0 %660
  %v663 = vmul.f32 %v657, %v661
  %665 = vrot.lane.b32.xlu0 %v663, 32
  %v666 = vpop.permute.xlu0 %665
  %v668 = vadd.f32 %v658, %v666
  %v669 = vtanh.pop %v668
  %671 = vrot.lane.b32.xlu0 %v669, 32
  %v672 = vpop.permute.xlu0 %671
  %v674 = vmul.f32 %v657, %v672
  %s675 = scalar_lea.vmem [#allocation2], 40
  %v676 = vld [vmem:[%s675] sm:$0xff]
  %678 = vrot.lane.b32.xlu0 %v674, 64
  %v679 = vpop.permute.xlu0 %678
  %v680 = vsel %vm188, %v679, 0
  %682 = vmatprep.subr.mxu0 0.0
  %683 = vmatpush1.msra.mxu0 %v178
  %684 = vmatprep.subr.mxu0 0.0
  %685 = vmatpush1.msra.mxu0 %v179
  %686 = vmatprep.subr.mxu0 0.0
  %687 = vmatpush1.msra.mxu0 %v180
  %688 = vmatprep.subr.mxu0 0.0
  %689 = vmatpush1.msra.mxu0 %v181
  %690 = vmatprep.subr.mxu0 0.0
  %691 = vmatpush1.msra.mxu0 0.0
  %692 = vmatprep.subr.mxu0 0.0
  %693 = vmatpush1.msra.mxu0 0.0
  %694 = vmatprep.subr.mxu0 0.0
  %695 = vmatpush1.msra.mxu0 0.0
  %696 = vmatprep.subr.mxu0 0.0
  %697 = vmatpush1.msra.mxu0 0.0
  %698 = vmatprep.subr.mxu0 0.0
  %699 = vmatpush1.msra.mxu0 0.0
  %700 = vmatprep.subr.mxu0 0.0
  %701 = vmatpush1.msra.mxu0 0.0
  %702 = vmatprep.subr.mxu0 0.0
  %703 = vmatpush1.msra.mxu0 0.0
  %704 = vmatprep.subr.mxu0 0.0
  %705 = vmatpush1.msra.mxu0 0.0
  %706 = vmatprep.subr.mxu0 0.0
  %707 = vmatpush1.msra.mxu0 0.0
  %708 = vmatprep.subr.mxu0 0.0
  %709 = vmatpush1.msra.mxu0 0.0
  %710 = vmatprep.subr.mxu0 0.0
  %711 = vmatpush1.msra.mxu0 0.0
  %712 = vmatprep.subr.mxu0 0.0
  %713 = vmatpush1.msra.mxu0 0.0
  %714 = vmatprep.subr.mxu0 0.0
  %715 = vmatpush1.msra.mxu0 0.0
  %716 = vmatprep.subr.mxu0 0.0
  %717 = vmatpush1.msra.mxu0 0.0
  %718 = vmatprep.subr.mxu0 0.0
  %719 = vmatpush1.msra.mxu0 0.0
  %720 = vmatprep.subr.mxu0 0.0
  %721 = vmatpush1.msra.mxu0 0.0
  %722 = vmatprep.subr.mxu0 0.0
  %723 = vmatpush1.msra.mxu0 0.0
  %724 = vmatprep.subr.mxu0 0.0
  %725 = vmatpush1.msra.mxu0 0.0
  %726 = vmatprep.subr.mxu0 0.0
  %727 = vmatpush1.msra.mxu0 0.0
  %728 = vmatprep.subr.mxu0 0.0
  %729 = vmatpush1.msra.mxu0 0.0
  %730 = vmatprep.subr.mxu0 0.0
  %731 = vmatpush1.msra.mxu0 0.0
  %732 = vmatprep.subr.mxu0 0.0
  %733 = vmatpush1.msra.mxu0 0.0
  %734 = vmatprep.subr.mxu0 0.0
  %735 = vmatpush1.msra.mxu0 0.0
  %736 = vmatprep.subr.mxu0 0.0
  %737 = vmatpush1.msra.mxu0 0.0
  %738 = vmatprep.subr.mxu0 0.0
  %739 = vmatpush1.msra.mxu0 0.0
  %740 = vmatprep.subr.mxu0 0.0
  %741 = vmatpush1.msra.mxu0 0.0
  %742 = vmatprep.subr.mxu0 0.0
  %743 = vmatpush1.msra.mxu0 0.0
  %744 = vmatprep.subr.mxu0 0.0
  %745 = vmatpush1.msra.mxu0 0.0
  %746 = vmatprep.mubr.f32.mxu0 0.0
  %747 = vmatmul.mubr.f32.gmra.mrb[0].mxu0 %v680
  %v748 = vpop.f32.mrb[0].mxu0
  %v749 = vadd.f32 0.0, %v748
  %v750 = vpop.f32.mrb[0].mxu0
  %751 = vdwg.mxu0
  %v752 = vadd.f32 %v676, %v749
  %v753 = vtanh.pop %v752
  %v754 = vmul.f32 %v753, %v185
  %v755 = vadd.f32 %v754, %v186
  %v756 = vmul.f32 %v755, %v668
  %758 = vrot.lane.b32.xlu0 %v755, 32
  %v759 = vpop.permute.xlu0 %758
  %v761 = vmul.f32 %v755, %v759
  %763 = vrot.lane.b32.xlu0 %v761, 32
  %v764 = vpop.permute.xlu0 %763
  %v766 = vadd.f32 %v756, %v764
  %v767 = vtanh.pop %v766
  %769 = vrot.lane.b32.xlu0 %v767, 32
  %v770 = vpop.permute.xlu0 %769
  %v772 = vmul.f32 %v755, %v770
  %s773 = scalar_lea.vmem [#allocation2], 48
  %v774 = vld [vmem:[%s773] sm:$0xff]
  %776 = vrot.lane.b32.xlu0 %v772, 64
  %v777 = vpop.permute.xlu0 %776
  %v778 = vsel %vm188, %v777, 0
  %780 = vmatprep.subr.mxu0 0.0
  %781 = vmatpush1.msra.mxu0 %v178
  %782 = vmatprep.subr.mxu0 0.0
  %783 = vmatpush1.msra.mxu0 %v179
  %784 = vmatprep.subr.mxu0 0.0
  %785 = vmatpush1.msra.mxu0 %v180
  %786 = vmatprep.subr.mxu0 0.0
  %787 = vmatpush1.msra.mxu0 %v181
  %788 = vmatprep.subr.mxu0 0.0
  %789 = vmatpush1.msra.mxu0 0.0
  %790 = vmatprep.subr.mxu0 0.0
  %791 = vmatpush1.msra.mxu0 0.0
  %792 = vmatprep.subr.mxu0 0.0
  %793 = vmatpush1.msra.mxu0 0.0
  %794 = vmatprep.subr.mxu0 0.0
  %795 = vmatpush1.msra.mxu0 0.0
  %796 = vmatprep.subr.mxu0 0.0
  %797 = vmatpush1.msra.mxu0 0.0
  %798 = vmatprep.subr.mxu0 0.0
  %799 = vmatpush1.msra.mxu0 0.0
  %800 = vmatprep.subr.mxu0 0.0
  %801 = vmatpush1.msra.mxu0 0.0
  %802 = vmatprep.subr.mxu0 0.0
  %803 = vmatpush1.msra.mxu0 0.0
  %804 = vmatprep.subr.mxu0 0.0
  %805 = vmatpush1.msra.mxu0 0.0
  %806 = vmatprep.subr.mxu0 0.0
  %807 = vmatpush1.msra.mxu0 0.0
  %808 = vmatprep.subr.mxu0 0.0
  %809 = vmatpush1.msra.mxu0 0.0
  %810 = vmatprep.subr.mxu0 0.0
  %811 = vmatpush1.msra.mxu0 0.0
  %812 = vmatprep.subr.mxu0 0.0
  %813 = vmatpush1.msra.mxu0 0.0
  %814 = vmatprep.subr.mxu0 0.0
  %815 = vmatpush1.msra.mxu0 0.0
  %816 = vmatprep.subr.mxu0 0.0
  %817 = vmatpush1.msra.mxu0 0.0
  %818 = vmatprep.subr.mxu0 0.0
  %819 = vmatpush1.msra.mxu0 0.0
  %820 = vmatprep.subr.mxu0 0.0
  %821 = vmatpush1.msra.mxu0 0.0
  %822 = vmatprep.subr.mxu0 0.0
  %823 = vmatpush1.msra.mxu0 0.0
  %824 = vmatprep.subr.mxu0 0.0
  %825 = vmatpush1.msra.mxu0 0.0
  %826 = vmatprep.subr.mxu0 0.0
  %827 = vmatpush1.msra.mxu0 0.0
  %828 = vmatprep.subr.mxu0 0.0
  %829 = vmatpush1.msra.mxu0 0.0
  %830 = vmatprep.subr.mxu0 0.0
  %831 = vmatpush1.msra.mxu0 0.0
  %832 = vmatprep.subr.mxu0 0.0
  %833 = vmatpush1.msra.mxu0 0.0
  %834 = vmatprep.subr.mxu0 0.0
  %835 = vmatpush1.msra.mxu0 0.0
  %836 = vmatprep.subr.mxu0 0.0
  %837 = vmatpush1.msra.mxu0 0.0
  %838 = vmatprep.subr.mxu0 0.0
  %839 = vmatpush1.msra.mxu0 0.0
  %840 = vmatprep.subr.mxu0 0.0
  %841 = vmatpush1.msra.mxu0 0.0
  %842 = vmatprep.subr.mxu0 0.0
  %843 = vmatpush1.msra.mxu0 0.0
  %844 = vmatprep.mubr.f32.mxu0 0.0
  %845 = vmatmul.mubr.f32.gmra.mrb[0].mxu0 %v778
  %v846 = vpop.f32.mrb[0].mxu0
  %v847 = vadd.f32 0.0, %v846
  %v848 = vpop.f32.mrb[0].mxu0
  %849 = vdwg.mxu0
  %v850 = vadd.f32 %v774, %v847
  %v851 = vtanh.pop %v850
  %v852 = vmul.f32 %v851, %v185
  %v853 = vadd.f32 %v852, %v186
  %v854 = vmul.f32 %v853, %v766
  %856 = vrot.lane.b32.xlu0 %v853, 32
  %v857 = vpop.permute.xlu0 %856
  %v859 = vmul.f32 %v853, %v857
  %861 = vrot.lane.b32.xlu0 %v859, 32
  %v862 = vpop.permute.xlu0 %861
  %v864 = vadd.f32 %v854, %v862
  %v865 = vtanh.pop %v864
  %867 = vrot.lane.b32.xlu0 %v865, 32
  %v868 = vpop.permute.xlu0 %867
  %v870 = vmul.f32 %v853, %v868
  %s871 = scalar_lea.vmem [#allocation2], 56
  %v872 = vld [vmem:[%s871] sm:$0xff]
  %874 = vrot.lane.b32.xlu0 %v870, 64
  %v875 = vpop.permute.xlu0 %874
  %v876 = vsel %vm188, %v875, 0
  %878 = vmatprep.subr.mxu0 0.0
  %879 = vmatpush1.msra.mxu0 %v178
  %880 = vmatprep.subr.mxu0 0.0
  %881 = vmatpush1.msra.mxu0 %v179
  %882 = vmatprep.subr.mxu0 0.0
  %883 = vmatpush1.msra.mxu0 %v180
  %884 = vmatprep.subr.mxu0 0.0
  %885 = vmatpush1.msra.mxu0 %v181
  %886 = vmatprep.subr.mxu0 0.0
  %887 = vmatpush1.msra.mxu0 0.0
  %888 = vmatprep.subr.mxu0 0.0
  %889 = vmatpush1.msra.mxu0 0.0
  %890 = vmatprep.subr.mxu0 0.0
  %891 = vmatpush1.msra.mxu0 0.0
  %892 = vmatprep.subr.mxu0 0.0
  %893 = vmatpush1.msra.mxu0 0.0
  %894 = vmatprep.subr.mxu0 0.0
  %895 = vmatpush1.msra.mxu0 0.0
  %896 = vmatprep.subr.mxu0 0.0
  %897 = vmatpush1.msra.mxu0 0.0
  %898 = vmatprep.subr.mxu0 0.0
  %899 = vmatpush1.msra.mxu0 0.0
  %900 = vmatprep.subr.mxu0 0.0
  %901 = vmatpush1.msra.mxu0 0.0
  %902 = vmatprep.subr.mxu0 0.0
  %903 = vmatpush1.msra.mxu0 0.0
  %904 = vmatprep.subr.mxu0 0.0
  %905 = vmatpush1.msra.mxu0 0.0
  %906 = vmatprep.subr.mxu0 0.0
  %907 = vmatpush1.msra.mxu0 0.0
  %908 = vmatprep.subr.mxu0 0.0
  %909 = vmatpush1.msra.mxu0 0.0
  %910 = vmatprep.subr.mxu0 0.0
  %911 = vmatpush1.msra.mxu0 0.0
  %912 = vmatprep.subr.mxu0 0.0
  %913 = vmatpush1.msra.mxu0 0.0
  %914 = vmatprep.subr.mxu0 0.0
  %915 = vmatpush1.msra.mxu0 0.0
  %916 = vmatprep.subr.mxu0 0.0
  %917 = vmatpush1.msra.mxu0 0.0
  %918 = vmatprep.subr.mxu0 0.0
  %919 = vmatpush1.msra.mxu0 0.0
  %920 = vmatprep.subr.mxu0 0.0
  %921 = vmatpush1.msra.mxu0 0.0
  %922 = vmatprep.subr.mxu0 0.0
  %923 = vmatpush1.msra.mxu0 0.0
  %924 = vmatprep.subr.mxu0 0.0
  %925 = vmatpush1.msra.mxu0 0.0
  %926 = vmatprep.subr.mxu0 0.0
  %927 = vmatpush1.msra.mxu0 0.0
  %928 = vmatprep.subr.mxu0 0.0
  %929 = vmatpush1.msra.mxu0 0.0
  %930 = vmatprep.subr.mxu0 0.0
  %931 = vmatpush1.msra.mxu0 0.0
  %932 = vmatprep.subr.mxu0 0.0
  %933 = vmatpush1.msra.mxu0 0.0
  %934 = vmatprep.subr.mxu0 0.0
  %935 = vmatpush1.msra.mxu0 0.0
  %936 = vmatprep.subr.mxu0 0.0
  %937 = vmatpush1.msra.mxu0 0.0
  %938 = vmatprep.subr.mxu0 0.0
  %939 = vmatpush1.msra.mxu0 0.0
  %940 = vmatprep.subr.mxu0 0.0
  %941 = vmatpush1.msra.mxu0 0.0
  %942 = vmatprep.mubr.f32.mxu0 0.0
  %943 = vmatmul.mubr.f32.gmra.mrb[0].mxu0 %v876
  %v944 = vpop.f32.mrb[0].mxu0
  %v945 = vadd.f32 0.0, %v944
  %v946 = vpop.f32.mrb[0].mxu0
  %947 = vdwg.mxu0
  %v948 = vadd.f32 %v872, %v945
  %v949 = vtanh.pop %v948
  %v950 = vmul.f32 %v949, %v185
  %v951 = vadd.f32 %v950, %v186
  %v952 = vmul.f32 %v951, %v864
  %954 = vrot.lane.b32.xlu0 %v951, 32
  %v955 = vpop.permute.xlu0 %954
  %v957 = vmul.f32 %v951, %v955
  %959 = vrot.lane.b32.xlu0 %v957, 32
  %v960 = vpop.permute.xlu0 %959
  %v962 = vadd.f32 %v952, %v960
  %v963 = vtanh.pop %v962
  %965 = vrot.lane.b32.xlu0 %v963, 32
  %v966 = vpop.permute.xlu0 %965
  %v968 = vmul.f32 %v951, %v966
  %v969 = vld [vmem:[%s4] sm:$0xff]
  %v970 = vld [vmem:[%s4 + $0x8] sm:$0xff]
  %v971 = vld [vmem:[%s4 + $0x10] sm:$0xff]
  %v972 = vld [vmem:[%s4 + $0x18] sm:$0xff]
  %v973 = vld [vmem:[%s5] sm:$0x1]
  %v975 = vlaneseq
  %v976 = vshrl.u32 %v975, 7
  %v977 = vsub.s32 0, %v976
  %v978 = vrot.slane %v973, %v977
  %981 = vrot.lane.b32.xlu0 %v968, 64
  %v982 = vpop.permute.xlu0 %981
  %v983 = vsel %vm188, %v982, 0
  %985 = vmatprep.subr.mxu0 0.0
  %986 = vmatpush1.msra.mxu0 %v969
  %987 = vmatprep.subr.mxu0 0.0
  %988 = vmatpush1.msra.mxu0 %v970
  %989 = vmatprep.subr.mxu0 0.0
  %990 = vmatpush1.msra.mxu0 %v971
  %991 = vmatprep.subr.mxu0 0.0
  %992 = vmatpush1.msra.mxu0 %v972
  %993 = vmatprep.subr.mxu0 0.0
  %994 = vmatpush1.msra.mxu0 0.0
  %995 = vmatprep.subr.mxu0 0.0
  %996 = vmatpush1.msra.mxu0 0.0
  %997 = vmatprep.subr.mxu0 0.0
  %998 = vmatpush1.msra.mxu0 0.0
  %999 = vmatprep.subr.mxu0 0.0
  %1000 = vmatpush1.msra.mxu0 0.0
  %1001 = vmatprep.subr.mxu0 0.0
  %1002 = vmatpush1.msra.mxu0 0.0
  %1003 = vmatprep.subr.mxu0 0.0
  %1004 = vmatpush1.msra.mxu0 0.0
  %1005 = vmatprep.subr.mxu0 0.0
  %1006 = vmatpush1.msra.mxu0 0.0
  %1007 = vmatprep.subr.mxu0 0.0
  %1008 = vmatpush1.msra.mxu0 0.0
  %1009 = vmatprep.subr.mxu0 0.0
  %1010 = vmatpush1.msra.mxu0 0.0
  %1011 = vmatprep.subr.mxu0 0.0
  %1012 = vmatpush1.msra.mxu0 0.0
  %1013 = vmatprep.subr.mxu0 0.0
  %1014 = vmatpush1.msra.mxu0 0.0
  %1015 = vmatprep.subr.mxu0 0.0
  %1016 = vmatpush1.msra.mxu0 0.0
  %1017 = vmatprep.subr.mxu0 0.0
  %1018 = vmatpush1.msra.mxu0 0.0
  %1019 = vmatprep.subr.mxu0 0.0
  %1020 = vmatpush1.msra.mxu0 0.0
  %1021 = vmatprep.subr.mxu0 0.0
  %1022 = vmatpush1.msra.mxu0 0.0
  %1023 = vmatprep.subr.mxu0 0.0
  %1024 = vmatpush1.msra.mxu0 0.0
  %1025 = vmatprep.subr.mxu0 0.0
  %1026 = vmatpush1.msra.mxu0 0.0
  %1027 = vmatprep.subr.mxu0 0.0
  %1028 = vmatpush1.msra.mxu0 0.0
  %1029 = vmatprep.subr.mxu0 0.0
  %1030 = vmatpush1.msra.mxu0 0.0
  %1031 = vmatprep.subr.mxu0 0.0
  %1032 = vmatpush1.msra.mxu0 0.0
  %1033 = vmatprep.subr.mxu0 0.0
  %1034 = vmatpush1.msra.mxu0 0.0
  %1035 = vmatprep.subr.mxu0 0.0
  %1036 = vmatpush1.msra.mxu0 0.0
  %1037 = vmatprep.subr.mxu0 0.0
  %1038 = vmatpush1.msra.mxu0 0.0
  %1039 = vmatprep.subr.mxu0 0.0
  %1040 = vmatpush1.msra.mxu0 0.0
  %1041 = vmatprep.subr.mxu0 0.0
  %1042 = vmatpush1.msra.mxu0 0.0
  %1043 = vmatprep.subr.mxu0 0.0
  %1044 = vmatpush1.msra.mxu0 0.0
  %1045 = vmatprep.subr.mxu0 0.0
  %1046 = vmatpush1.msra.mxu0 0.0
  %1047 = vmatprep.subr.mxu0 0.0
  %1048 = vmatpush1.msra.mxu0 0.0
  %1049 = vmatprep.mubr.f32.mxu0 0.0
  %1050 = vmatmul.mubr.f32.gmra.mrb[0].mxu0 %v983
  %v1051 = vpop.f32.mrb[0].mxu0
  %v1052 = vadd.f32 %v978, %v1051
  %v1053 = vpop.f32.mrb[0].mxu0
  %1054 = vdwg.mxu0
  %1055 = vst [vmem:[%s6] sm:$0xff] %v1052
  // Predicated region
  $region26: #{lstm_variational_encoder.1} parent=0 // pred_check
    _
  $region27: #{lstm_variational_encoder.1} parent=0 // pred_check_branch
    %1057 = sbr.rel (0) target = $region29
  $region28: #{lstm_variational_encoder.1} parent=0 // pred_region
    _
  $region29: #{lstm_variational_encoder.1} parent=0 // pred_fallthru
    _
  // Predicated region
  $region30: #{lstm_variational_encoder.1} parent=0 // pred_check
    _
  $region31: #{lstm_variational_encoder.1} parent=0 // pred_check_branch
    %1059 = sbr.rel (0) target = $region33
  $region32: #{lstm_variational_encoder.1} parent=0 // pred_region
    _
  $region33: #{lstm_variational_encoder.1} parent=0 // pred_fallthru
    _

</llo_original>
